<compile_context>
chip_gen: v7x
topology: tpu7x:2x2x1
jax: 0.10.0
libtpu: 0.0.40
codegen_flags: <defaults>
</compile_context>

<pallas_src>
import functools

import numpy as np
import jax
import jax.numpy as jnp
from jax.experimental import pallas as pl
from jax.experimental.pallas import tpu as pltpu


# --------------------------------------------------------------------------
# Static layout constants
# --------------------------------------------------------------------------
L_PAD = 128      # hidden width padded 64 -> 128 (lane-dense K and N)
A_PAD = 128      # action head padded 4 -> 128 (lane-dense N)
K_PAD = 896      # first-layer K: 776 real features padded to 7*128


# --------------------------------------------------------------------------
# Kernel
# --------------------------------------------------------------------------
def bc_kernel(x_ref, wt_ref, wh_ref, b_ref, out_ref, *, s_prod):
    # ---- carve the packed slabs (static, aligned slices) ----
    w1 = wt_ref[:K_PAD, :]                       # (896, 128) bf16
    w2 = wt_ref[K_PAD:K_PAD + L_PAD, :]          # (128, 128) bf16
    w3 = wt_ref[K_PAD + L_PAD:K_PAD + 2 * L_PAD, :]
    b1 = b_ref[:, :L_PAD]                        # (1, 128) f32
    b2 = b_ref[:, L_PAD:2 * L_PAD]
    b3 = b_ref[:, 2 * L_PAD:3 * L_PAD]
    bh = b_ref[:, 3 * L_PAD:]                    # (1, 640) f32

    # ---- trunk: Linear -> ReLU -> Linear -> ReLU -> Linear -> Sigmoid ----
    # bf16 MXU operands, f32 accumulation, f32 elementwise (v5e-safe).
    h = jnp.dot(x_ref[...], w1, preferred_element_type=jnp.float32) + b1
    h = jnp.maximum(h, 0.0)

    h = jnp.dot(h.astype(jnp.bfloat16), w2,
                preferred_element_type=jnp.float32) + b2
    h = jnp.maximum(h, 0.0)

    h = jnp.dot(h.astype(jnp.bfloat16), w3,
                preferred_element_type=jnp.float32) + b3
    h = jax.nn.sigmoid(h)

    # ---- fused heads: single (128, 640) matmul ----
    # (padded hidden lanes are sigmoid(0)=0.5 but matching wh rows are zero)
    y = jnp.dot(h.astype(jnp.bfloat16), wh_ref[...],
                preferred_element_type=jnp.float32) + bh

    # state + future heads: one sigmoid, one contiguous 128-aligned store.
    out_ref[:, :2 * s_prod] = jax.nn.sigmoid(y[:, :2 * s_prod])

    # action head: softmax over cols [2*s_prod, 2*s_prod + A_PAD).
    # Real logits are bounded (no overflow); padded logits carry a -1e30
    # bias so exp underflows to exactly 0 -> no max subtraction needed.
    ea = jnp.exp(y[:, 2 * s_prod:])
    inv = pl.reciprocal(jnp.sum(ea, axis=1, keepdims=True), approx=True)
    out_ref[:, 2 * s_prod:] = ea * inv


# --------------------------------------------------------------------------
# Parameter construction (mirrors torch.nn.Linear default init), + packing
# --------------------------------------------------------------------------
def init_bc_params(key, state_size, action_size, layer_size, frames):
    """Logical params at true sizes; weights stored (in_features, out_features)."""
    s_prod = int(np.prod(state_size))
    in_dim = frames * s_prod + (frames - 1) * action_size
    dims = {
        "l1": (in_dim, layer_size),
        "l2": (layer_size, layer_size),
        "l3": (layer_size, layer_size),
        "state": (layer_size, s_prod),
        "future": (layer_size, s_prod),
        "action": (layer_size, action_size),
    }
    params = {}
    for name, (fan_in, fan_out) in dims.items():
        key, kw, kb = jax.random.split(key, 3)
        bound = 1.0 / np.sqrt(fan_in)
        w = jax.random.uniform(kw, (fan_in, fan_out), jnp.float32, -bound, bound)
        b = jax.random.uniform(kb, (1, fan_out), jnp.float32, -bound, bound)
        params[name] = (w, b)
    return params


def pack_bc_params(params, state_size, action_size, layer_size):
    """Pack all weights into 2 bf16 slabs + 1 f32 bias slab (3 DMAs total)."""
    s_prod = int(np.prod(state_size))

    def pad2(x, rows, cols):
        return jnp.pad(x, ((0, rows - x.shape[0]), (0, cols - x.shape[1])))

    w1, b1 = params["l1"]
    w2, b2 = params["l2"]
    w3, b3 = params["l3"]
    # trunk slab: rows [0,896) = W1 (776 real rows, zero-padded),
    #             rows [896,1024) = W2, rows [1024,1152) = W3.
    w_trunk = jnp.concatenate(
        [pad2(w1, K_PAD, L_PAD), pad2(w2, L_PAD, L_PAD), pad2(w3, L_PAD, L_PAD)],
        axis=0).astype(jnp.bfloat16)                         # (1152, 128)

    ws, bs = params["state"]
    wf, bf = params["future"]
    wa, ba = params["action"]
    wa_p = pad2(wa, layer_size, A_PAD)                       # zero-pad action cols
    w_head = pad2(jnp.concatenate([ws, wf, wa_p], axis=1),
                  L_PAD, 2 * s_prod + A_PAD).astype(jnp.bfloat16)   # (128, 640)

    ba_p = jnp.concatenate(
        [ba, jnp.full((1, A_PAD - action_size), -1e30, jnp.float32)], axis=1)
    bias = jnp.concatenate(
        [pad2(b1, 1, L_PAD), pad2(b2, 1, L_PAD), pad2(b3, 1, L_PAD),
         bs, bf, ba_p], axis=1).astype(jnp.float32)          # (1, 1024)

    return [w_trunk, w_head, bias]


# --------------------------------------------------------------------------
# Wrapper
# --------------------------------------------------------------------------
def bc_forward(states, actions, packed, *, state_size, action_size):
    B = states.shape[0]
    s_prod = int(np.prod(state_size))
    head_out = 2 * s_prod + A_PAD
    b_pad = -(-B // 8) * 8                       # full sublanes

    # concat + pad + bf16 cast all live in one tiny XLA fusion.
    x = jnp.concatenate([states.reshape(B, -1), actions.reshape(B, -1)], axis=1)
    x = jnp.pad(x, ((0, b_pad - B), (0, K_PAD - x.shape[1]))).astype(jnp.bfloat16)

    inputs = [x] + list(packed)
    vmem = pl.BlockSpec(memory_space=pltpu.MemorySpace.VMEM)

    flops = 2 * b_pad * (K_PAD * L_PAD + 2 * L_PAD * L_PAD + L_PAD * head_out)
    bytes_accessed = int(
        sum(int(np.prod(a.shape)) * a.dtype.itemsize for a in inputs)
        + b_pad * head_out * 4)
    transcendentals = b_pad * (L_PAD + head_out + 1)

    kern = functools.partial(bc_kernel, s_prod=s_prod)

    out = pl.pallas_call(
        kern,
        out_shape=jax.ShapeDtypeStruct((b_pad, head_out), jnp.float32),
        in_specs=[vmem] * len(inputs),
        out_specs=vmem,
        cost_estimate=pl.CostEstimate(flops=flops,
                                      transcendentals=transcendentals,
                                      bytes_accessed=bytes_accessed),
    )(*inputs)

    state = out[:B, :s_prod]
    future = out[:B, s_prod:2 * s_prod]
    action = out[:B, 2 * s_prod:2 * s_prod + action_size]
    return state, action, future


# Pure-JAX f32 reference (matches the PyTorch module's forward).
def bc_reference(states, actions, params):
    B = states.shape[0]
    x = jnp.concatenate([states.reshape(B, -1), actions.reshape(B, -1)], axis=1)
    w1, b1 = params["l1"]
    w2, b2 = params["l2"]
    w3, b3 = params["l3"]
    h = jax.nn.relu(x @ w1 + b1)
    h = jax.nn.relu(h @ w2 + b2)
    h = jax.nn.sigmoid(h @ w3 + b3)
    ws, bs = params["state"]
    wf, bf = params["future"]
    wa, ba = params["action"]
    state = jax.nn.sigmoid(h @ ws + bs)
    future = jax.nn.sigmoid(h @ wf + bf)
    action = jax.nn.softmax(h @ wa + ba, axis=1)
    return state, action, future


if __name__ == "__main__":
    # Config consistent with the module:
    #   state_size = (C, H, W) = (4, 8, 8), frames (T) = 3, action_size = 4,
    #   layer_size = 64, batch = 2.
    state_size = (4, 8, 8)
    action_size = 4
    layer_size = 64
    frames = 3
    B = 2

    key = jax.random.PRNGKey(0)
    key, k_s, k_a, k_p = jax.random.split(key, 4)

    states = jax.random.uniform(k_s, (B, frames) + state_size, jnp.float32)
    actions = jax.random.uniform(k_a, (B, frames - 1, action_size), jnp.float32)

    params = init_bc_params(k_p, state_size, action_size, layer_size, frames)
    packed = pack_bc_params(params, state_size, action_size, layer_size)

    fwd = jax.jit(functools.partial(
        bc_forward, state_size=state_size, action_size=action_size))

    state, action, future = fwd(states, actions, packed)
    jax.block_until_ready((state, action, future))

    s_prod = int(np.prod(state_size))
    assert state.shape == (B, s_prod)
    assert future.shape == (B, s_prod)
    assert action.shape == (B, action_size)

    # Softmax rows sum to ~1 (approx reciprocal on EUP -> ~1e-3 relative).
    assert np.allclose(np.asarray(jnp.sum(action, axis=1)), 1.0, atol=5e-3)

    # Compare against the f32 reference (bf16 MXU inputs -> loose tolerance).
    ref_s, ref_a, ref_f = bc_reference(states, actions, params)
    np.testing.assert_allclose(np.asarray(state), np.asarray(ref_s), atol=3e-2)
    np.testing.assert_allclose(np.asarray(future), np.asarray(ref_f), atol=3e-2)
    np.testing.assert_allclose(np.asarray(action), np.asarray(ref_a), atol=3e-2)

    print("KERNEL_OK")
</pallas_src>

<mosaic_0001>
module attributes {stable_mosaic.version = 11 : i64} {
  func.func @bc_kernel(%arg0: memref<8x896xbf16, #tpu.memory_space<vmem>>, %arg1: memref<1152x128xbf16, #tpu.memory_space<vmem>>, %arg2: memref<128x640xbf16, #tpu.memory_space<vmem>>, %arg3: memref<1x1024xf32, #tpu.memory_space<vmem>>, %arg4: memref<8x640xf32, #tpu.memory_space<vmem>>) attributes {dimension_semantics = [], scalar_prefetch = 0 : i64, scratch_operands = 0 : i64, tpu.core_type = #tpu.core_type<tc>} {
    %c0 = arith.constant 0 : index
    %c0_0 = arith.constant 0 : index
    %0 = vector.load %arg1[%c0, %c0_0] : memref<1152x128xbf16, #tpu.memory_space<vmem>>, vector<896x128xbf16>
    %c896 = arith.constant 896 : index
    %c0_1 = arith.constant 0 : index
    %1 = vector.load %arg1[%c896, %c0_1] : memref<1152x128xbf16, #tpu.memory_space<vmem>>, vector<128x128xbf16>
    %c1024 = arith.constant 1024 : index
    %c0_2 = arith.constant 0 : index
    %2 = vector.load %arg1[%c1024, %c0_2] : memref<1152x128xbf16, #tpu.memory_space<vmem>>, vector<128x128xbf16>
    %c0_3 = arith.constant 0 : index
    %c0_4 = arith.constant 0 : index
    %3 = vector.load %arg3[%c0_3, %c0_4] : memref<1x1024xf32, #tpu.memory_space<vmem>>, vector<1x128xf32>
    %c0_5 = arith.constant 0 : index
    %c128 = arith.constant 128 : index
    %4 = vector.load %arg3[%c0_5, %c128] : memref<1x1024xf32, #tpu.memory_space<vmem>>, vector<1x128xf32>
    %c0_6 = arith.constant 0 : index
    %c256 = arith.constant 256 : index
    %5 = vector.load %arg3[%c0_6, %c256] : memref<1x1024xf32, #tpu.memory_space<vmem>>, vector<1x128xf32>
    %c0_7 = arith.constant 0 : index
    %c384 = arith.constant 384 : index
    %6 = vector.load %arg3[%c0_7, %c384] : memref<1x1024xf32, #tpu.memory_space<vmem>>, vector<1x640xf32>
    %c0_8 = arith.constant 0 : index
    %c0_9 = arith.constant 0 : index
    %7 = vector.load %arg0[%c0_8, %c0_9] : memref<8x896xbf16, #tpu.memory_space<vmem>>, vector<8x896xbf16>
    %cst = arith.constant dense<0.000000e+00> : vector<8x128xf32>
    %8 = tpu.matmul %7, %0, %cst {dimension_numbers = #tpu.dot_dimension_numbers<[1], [0], [0], [1], [0, 0, 1, 1], [], []>} : vector<8x896xbf16>, vector<896x128xbf16>, vector<8x128xf32> -> vector<8x128xf32>
    %9 = vector.broadcast %3 : vector<1x128xf32> to vector<8x128xf32>
    %10 = arith.addf %8, %9 : vector<8x128xf32>
    %cst_10 = arith.constant 0.000000e+00 : f32
    %11 = vector.broadcast %cst_10 : f32 to vector<8x128xf32>
    %12 = arith.maximumf %10, %11 : vector<8x128xf32>
    %13 = arith.truncf %12 : vector<8x128xf32> to vector<8x128xbf16>
    %cst_11 = arith.constant dense<0.000000e+00> : vector<8x128xf32>
    %14 = tpu.matmul %13, %1, %cst_11 {dimension_numbers = #tpu.dot_dimension_numbers<[1], [0], [0], [1], [0, 0, 1, 1], [], []>} : vector<8x128xbf16>, vector<128x128xbf16>, vector<8x128xf32> -> vector<8x128xf32>
    %15 = vector.broadcast %4 : vector<1x128xf32> to vector<8x128xf32>
    %16 = arith.addf %14, %15 : vector<8x128xf32>
    %cst_12 = arith.constant 0.000000e+00 : f32
    %17 = vector.broadcast %cst_12 : f32 to vector<8x128xf32>
    %18 = arith.maximumf %16, %17 : vector<8x128xf32>
    %19 = arith.truncf %18 : vector<8x128xf32> to vector<8x128xbf16>
    %cst_13 = arith.constant dense<0.000000e+00> : vector<8x128xf32>
    %20 = tpu.matmul %19, %2, %cst_13 {dimension_numbers = #tpu.dot_dimension_numbers<[1], [0], [0], [1], [0, 0, 1, 1], [], []>} : vector<8x128xbf16>, vector<128x128xbf16>, vector<8x128xf32> -> vector<8x128xf32>
    %21 = vector.broadcast %5 : vector<1x128xf32> to vector<8x128xf32>
    %22 = arith.addf %20, %21 : vector<8x128xf32>
    %23 = arith.negf %22 : vector<8x128xf32>
    %24 = math.exp %23 : vector<8x128xf32>
    %cst_14 = arith.constant 1.000000e+00 : f32
    %25 = vector.broadcast %cst_14 : f32 to vector<8x128xf32>
    %26 = arith.addf %25, %24 : vector<8x128xf32>
    %27 = arith.divf %25, %26 : vector<8x128xf32>
    %28 = arith.truncf %27 : vector<8x128xf32> to vector<8x128xbf16>
    %c0_15 = arith.constant 0 : index
    %c0_16 = arith.constant 0 : index
    %29 = vector.load %arg2[%c0_15, %c0_16] : memref<128x640xbf16, #tpu.memory_space<vmem>>, vector<128x640xbf16>
    %cst_17 = arith.constant dense<0.000000e+00> : vector<8x640xf32>
    %30 = tpu.matmul %28, %29, %cst_17 {dimension_numbers = #tpu.dot_dimension_numbers<[1], [0], [0], [1], [0, 0, 1, 1], [], []>} : vector<8x128xbf16>, vector<128x640xbf16>, vector<8x640xf32> -> vector<8x640xf32>
    %31 = vector.broadcast %6 : vector<1x640xf32> to vector<8x640xf32>
    %32 = arith.addf %30, %31 : vector<8x640xf32>
    %33 = vector.extract_strided_slice %32 {offsets = [0, 0], sizes = [8, 512], strides = [1, 1]} : vector<8x640xf32> to vector<8x512xf32>
    %34 = arith.negf %33 : vector<8x512xf32>
    %35 = math.exp %34 : vector<8x512xf32>
    %cst_18 = arith.constant 1.000000e+00 : f32
    %36 = vector.broadcast %cst_18 : f32 to vector<8x512xf32>
    %37 = arith.addf %36, %35 : vector<8x512xf32>
    %38 = arith.divf %36, %37 : vector<8x512xf32>
    %c0_19 = arith.constant 0 : index
    %c0_20 = arith.constant 0 : index
    %39 = vector.load %arg4[%c0_19, %c0_20] : memref<8x640xf32, #tpu.memory_space<vmem>>, vector<8x512xf32>
    tpu.vector_store %arg4[%c0_19, %c0_20], %38 {strides = array<i32>} : memref<8x640xf32, #tpu.memory_space<vmem>>, vector<8x512xf32>,
    %40 = vector.extract_strided_slice %32 {offsets = [0, 512], sizes = [8, 128], strides = [1, 1]} : vector<8x640xf32> to vector<8x128xf32>
    %41 = math.exp %40 : vector<8x128xf32>
    %cst_21 = arith.constant dense<0.000000e+00> : vector<8xf32>
    %42 = vector.multi_reduction <add>, %41, %cst_21 [1] : vector<8x128xf32> to vector<8xf32>
    %43 = vector.shape_cast %42 : vector<8xf32> to vector<8x1xf32>
    %44 = tpu.reciprocal %43 {approx = true} : vector<8x1xf32> -> vector<8x1xf32>
    %45 = vector.broadcast %44 : vector<8x1xf32> to vector<8x128xf32>
    %46 = arith.mulf %41, %45 : vector<8x128xf32>
    %c0_22 = arith.constant 0 : index
    %c512 = arith.constant 512 : index
    %47 = vector.load %arg4[%c0_22, %c512] : memref<8x640xf32, #tpu.memory_space<vmem>>, vector<8x128xf32>
    tpu.vector_store %arg4[%c0_22, %c512], %46 {strides = array<i32>} : memref<8x640xf32, #tpu.memory_space<vmem>>, vector<8x128xf32>,
    return
  }
}

</mosaic_0001>

<llo_original>
// kernel: bc_forward.1
$region0: #{bc_forward.1}
  #allocation0 [shape = 'u32[]', space=smem, size = 0x4, offset = 0x4, fixed_abs, tag = 'smem constant byte address 0x4 - core index']
  #allocation1 [shape = 'u32[144,128]{1,0:T(1,128)}', space=vmem, size = 0x12000, scoped, tag = 'internal scratch']
  %s0 = inlined_call_operand.vmem [shape: bf16[8,896], index: 0, kind: input, shape index: {}]
  %s1 = inlined_call_operand.hbm [shape: bf16[1152,128], index: 1, kind: input, shape index: {}]
  %s2 = inlined_call_operand.vmem [shape: bf16[128,640], index: 2, kind: input, shape index: {}]
  %s3 = inlined_call_operand.vmem [shape: f32[1,1024], index: 3, kind: input, shape index: {}]
  %s4 = inlined_call_operand.vmem [shape: f32[8,640], index: 4, kind: output, shape index: {}]
  %s5 = sld [smem:[#allocation0]]
  $region30: #{bc_forward.1} parent=0
    _
  %s7 = ssub.s32 1, %s5
  %s8 = scalar_select 0, %s7, %s5
  $region1: #{bc_forward.1} parent=0
    #allocation2 [shape = 'u8[294912]{0}', space=vmem, size = 0x48000, scoped, tag = 'input window, operand 1, single buffered']
    #allocation3 [shape = 's32[1]{0}', space=sflag, size = 0x4, scoped, tag = 'scoped memory for bc_forward.1']
    %9 = vsyncpa [#allocation3], 0
    // Predicated region
    $region2: #{bc_forward.1} parent=1 // pred_check
      _
    $region3: #{bc_forward.1} parent=1 // pred_check_branch
      %11 = sbr.rel (0) target = $region5
    $region4: #{bc_forward.1} parent=1 // pred_region
      _
    $region5: #{bc_forward.1} parent=1 // pred_fallthru
      _
    // Predicated region
    $region6: #{bc_forward.1} parent=1 // pred_check
      _
    $region7: #{bc_forward.1} parent=1 // pred_check_branch
      %13 = sbr.rel (0) target = $region9
    $region8: #{bc_forward.1} parent=1 // pred_region
      %s15 = ssub.s32 9216, 9216
      %16 = vsyncadd [#allocation3], %s15
      %s17 = sshll.u32 [#allocation2], 4
      %s18 = int_to_ptr.vmem [resolvable:$true] %s17
      %23 = dma.hbm_to_vmem [thread:$0]  %s1, 9216, %s18, [#allocation3], 64, 64, 4
    $region9: #{bc_forward.1} parent=1 // pred_fallthru
      _
    // Predicated region
    $region10: #{bc_forward.1} parent=1 // pred_check
      _
    $region11: #{bc_forward.1} parent=1 // pred_check_branch
      %25 = sbr.rel (0) target = $region13
    $region12: #{bc_forward.1} parent=1 // pred_region
      _
    $region13: #{bc_forward.1} parent=1 // pred_fallthru
      _
    // Predicated region
    $region14: #{bc_forward.1} parent=1 // pred_check
      _
    $region15: #{bc_forward.1} parent=1 // pred_check_branch
      %27 = sbr.rel (0) target = $region17
    $region16: #{bc_forward.1} parent=1 // pred_region
      _
    $region17: #{bc_forward.1} parent=1 // pred_fallthru
      _
    // Predicated region
    $region18: #{bc_forward.1} parent=1 // pred_check
      _
    $region19: #{bc_forward.1} parent=1 // pred_check_branch
      %29 = sbr.rel (0) target = $region21
    $region20: #{bc_forward.1} parent=1 // pred_region
      %30 = dma.done [#allocation3], 9216
    $region21: #{bc_forward.1} parent=1 // pred_fallthru
      _
    %v32 = vld [vmem:[#allocation2] sm:$0xf]
    %v33 = vld [vmem:[#allocation2 + $0x4] sm:$0xf]
    %v34 = vld [vmem:[#allocation2 + $0x8] sm:$0xf]
    %v35 = vld [vmem:[#allocation2 + $0xc] sm:$0xf]
    %v36 = vld [vmem:[#allocation2 + $0x10] sm:$0xf]
    %v37 = vld [vmem:[#allocation2 + $0x14] sm:$0xf]
    %v38 = vld [vmem:[#allocation2 + $0x18] sm:$0xf]
    %v39 = vld [vmem:[#allocation2 + $0x1c] sm:$0xf]
    %v40 = vld [vmem:[#allocation2 + $0x20] sm:$0xf]
    %v41 = vld [vmem:[#allocation2 + $0x24] sm:$0xf]
    %v42 = vld [vmem:[#allocation2 + $0x28] sm:$0xf]
    %v43 = vld [vmem:[#allocation2 + $0x2c] sm:$0xf]
    %v44 = vld [vmem:[#allocation2 + $0x30] sm:$0xf]
    %v45 = vld [vmem:[#allocation2 + $0x34] sm:$0xf]
    %v46 = vld [vmem:[#allocation2 + $0x38] sm:$0xf]
    %v47 = vld [vmem:[#allocation2 + $0x3c] sm:$0xf]
    %v48 = vld [vmem:[#allocation2 + $0x40] sm:$0xf]
    %v49 = vld [vmem:[#allocation2 + $0x44] sm:$0xf]
    %v50 = vld [vmem:[#allocation2 + $0x48] sm:$0xf]
    %v51 = vld [vmem:[#allocation2 + $0x4c] sm:$0xf]
    %v52 = vld [vmem:[#allocation2 + $0x50] sm:$0xf]
    %v53 = vld [vmem:[#allocation2 + $0x54] sm:$0xf]
    %v54 = vld [vmem:[#allocation2 + $0x58] sm:$0xf]
    %v55 = vld [vmem:[#allocation2 + $0x5c] sm:$0xf]
    %v56 = vld [vmem:[#allocation2 + $0x60] sm:$0xf]
    %v57 = vld [vmem:[#allocation2 + $0x64] sm:$0xf]
    %v58 = vld [vmem:[#allocation2 + $0x68] sm:$0xf]
    %v59 = vld [vmem:[#allocation2 + $0x6c] sm:$0xf]
    %v60 = vld [vmem:[#allocation2 + $0x70] sm:$0xf]
    %v61 = vld [vmem:[#allocation2 + $0x74] sm:$0xf]
    %v62 = vld [vmem:[#allocation2 + $0x78] sm:$0xf]
    %v63 = vld [vmem:[#allocation2 + $0x7c] sm:$0xf]
    %v64 = vld [vmem:[#allocation2 + $0x80] sm:$0xf]
    %v65 = vld [vmem:[#allocation2 + $0x84] sm:$0xf]
    %v66 = vld [vmem:[#allocation2 + $0x88] sm:$0xf]
    %v67 = vld [vmem:[#allocation2 + $0x8c] sm:$0xf]
    %v68 = vld [vmem:[#allocation2 + $0x90] sm:$0xf]
    %v69 = vld [vmem:[#allocation2 + $0x94] sm:$0xf]
    %v70 = vld [vmem:[#allocation2 + $0x98] sm:$0xf]
    %v71 = vld [vmem:[#allocation2 + $0x9c] sm:$0xf]
    %v72 = vld [vmem:[#allocation2 + $0xa0] sm:$0xf]
    %v73 = vld [vmem:[#allocation2 + $0xa4] sm:$0xf]
    %v74 = vld [vmem:[#allocation2 + $0xa8] sm:$0xf]
    %v75 = vld [vmem:[#allocation2 + $0xac] sm:$0xf]
    %v76 = vld [vmem:[#allocation2 + $0xb0] sm:$0xf]
    %v77 = vld [vmem:[#allocation2 + $0xb4] sm:$0xf]
    %v78 = vld [vmem:[#allocation2 + $0xb8] sm:$0xf]
    %v79 = vld [vmem:[#allocation2 + $0xbc] sm:$0xf]
    %v80 = vld [vmem:[#allocation2 + $0xc0] sm:$0xf]
    %v81 = vld [vmem:[#allocation2 + $0xc4] sm:$0xf]
    %v82 = vld [vmem:[#allocation2 + $0xc8] sm:$0xf]
    %v83 = vld [vmem:[#allocation2 + $0xcc] sm:$0xf]
    %v84 = vld [vmem:[#allocation2 + $0xd0] sm:$0xf]
    %v85 = vld [vmem:[#allocation2 + $0xd4] sm:$0xf]
    %v86 = vld [vmem:[#allocation2 + $0xd8] sm:$0xf]
    %v87 = vld [vmem:[#allocation2 + $0xdc] sm:$0xf]
    %v88 = vld [vmem:[#allocation2 + $0xe0] sm:$0xf]
    %v89 = vld [vmem:[#allocation2 + $0xe4] sm:$0xf]
    %v90 = vld [vmem:[#allocation2 + $0xe8] sm:$0xf]
    %v91 = vld [vmem:[#allocation2 + $0xec] sm:$0xf]
    %v92 = vld [vmem:[#allocation2 + $0xf0] sm:$0xf]
    %v93 = vld [vmem:[#allocation2 + $0xf4] sm:$0xf]
    %v94 = vld [vmem:[#allocation2 + $0xf8] sm:$0xf]
    %v95 = vld [vmem:[#allocation2 + $0xfc] sm:$0xf]
    %v96 = vld [vmem:[#allocation2 + $0x100] sm:$0xf]
    %v97 = vld [vmem:[#allocation2 + $0x104] sm:$0xf]
    %v98 = vld [vmem:[#allocation2 + $0x108] sm:$0xf]
    %v99 = vld [vmem:[#allocation2 + $0x10c] sm:$0xf]
    %v100 = vld [vmem:[#allocation2 + $0x110] sm:$0xf]
    %v101 = vld [vmem:[#allocation2 + $0x114] sm:$0xf]
    %v102 = vld [vmem:[#allocation2 + $0x118] sm:$0xf]
    %v103 = vld [vmem:[#allocation2 + $0x11c] sm:$0xf]
    %v104 = vld [vmem:[#allocation2 + $0x120] sm:$0xf]
    %v105 = vld [vmem:[#allocation2 + $0x124] sm:$0xf]
    %v106 = vld [vmem:[#allocation2 + $0x128] sm:$0xf]
    %v107 = vld [vmem:[#allocation2 + $0x12c] sm:$0xf]
    %v108 = vld [vmem:[#allocation2 + $0x130] sm:$0xf]
    %v109 = vld [vmem:[#allocation2 + $0x134] sm:$0xf]
    %v110 = vld [vmem:[#allocation2 + $0x138] sm:$0xf]
    %v111 = vld [vmem:[#allocation2 + $0x13c] sm:$0xf]
    %v112 = vld [vmem:[#allocation2 + $0x140] sm:$0xf]
    %v113 = vld [vmem:[#allocation2 + $0x144] sm:$0xf]
    %v114 = vld [vmem:[#allocation2 + $0x148] sm:$0xf]
    %v115 = vld [vmem:[#allocation2 + $0x14c] sm:$0xf]
    %v116 = vld [vmem:[#allocation2 + $0x150] sm:$0xf]
    %v117 = vld [vmem:[#allocation2 + $0x154] sm:$0xf]
    %v118 = vld [vmem:[#allocation2 + $0x158] sm:$0xf]
    %v119 = vld [vmem:[#allocation2 + $0x15c] sm:$0xf]
    %v120 = vld [vmem:[#allocation2 + $0x160] sm:$0xf]
    %v121 = vld [vmem:[#allocation2 + $0x164] sm:$0xf]
    %v122 = vld [vmem:[#allocation2 + $0x168] sm:$0xf]
    %v123 = vld [vmem:[#allocation2 + $0x16c] sm:$0xf]
    %v124 = vld [vmem:[#allocation2 + $0x170] sm:$0xf]
    %v125 = vld [vmem:[#allocation2 + $0x174] sm:$0xf]
    %v126 = vld [vmem:[#allocation2 + $0x178] sm:$0xf]
    %v127 = vld [vmem:[#allocation2 + $0x17c] sm:$0xf]
    %v128 = vld [vmem:[#allocation2 + $0x180] sm:$0xf]
    %v129 = vld [vmem:[#allocation2 + $0x184] sm:$0xf]
    %v130 = vld [vmem:[#allocation2 + $0x188] sm:$0xf]
    %v131 = vld [vmem:[#allocation2 + $0x18c] sm:$0xf]
    %v132 = vld [vmem:[#allocation2 + $0x190] sm:$0xf]
    %v133 = vld [vmem:[#allocation2 + $0x194] sm:$0xf]
    %v134 = vld [vmem:[#allocation2 + $0x198] sm:$0xf]
    %v135 = vld [vmem:[#allocation2 + $0x19c] sm:$0xf]
    %v136 = vld [vmem:[#allocation2 + $0x1a0] sm:$0xf]
    %v137 = vld [vmem:[#allocation2 + $0x1a4] sm:$0xf]
    %v138 = vld [vmem:[#allocation2 + $0x1a8] sm:$0xf]
    %v139 = vld [vmem:[#allocation2 + $0x1ac] sm:$0xf]
    %v140 = vld [vmem:[#allocation2 + $0x1b0] sm:$0xf]
    %v141 = vld [vmem:[#allocation2 + $0x1b4] sm:$0xf]
    %v142 = vld [vmem:[#allocation2 + $0x1b8] sm:$0xf]
    %v143 = vld [vmem:[#allocation2 + $0x1bc] sm:$0xf]
    %v144 = vld [vmem:[#allocation2 + $0x1c0] sm:$0xf]
    %v145 = vld [vmem:[#allocation2 + $0x1c4] sm:$0xf]
    %v146 = vld [vmem:[#allocation2 + $0x1c8] sm:$0xf]
    %v147 = vld [vmem:[#allocation2 + $0x1cc] sm:$0xf]
    %v148 = vld [vmem:[#allocation2 + $0x1d0] sm:$0xf]
    %v149 = vld [vmem:[#allocation2 + $0x1d4] sm:$0xf]
    %v150 = vld [vmem:[#allocation2 + $0x1d8] sm:$0xf]
    %v151 = vld [vmem:[#allocation2 + $0x1dc] sm:$0xf]
    %v152 = vld [vmem:[#allocation2 + $0x1e0] sm:$0xf]
    %v153 = vld [vmem:[#allocation2 + $0x1e4] sm:$0xf]
    %v154 = vld [vmem:[#allocation2 + $0x1e8] sm:$0xf]
    %v155 = vld [vmem:[#allocation2 + $0x1ec] sm:$0xf]
    %v156 = vld [vmem:[#allocation2 + $0x1f0] sm:$0xf]
    %v157 = vld [vmem:[#allocation2 + $0x1f4] sm:$0xf]
    %v158 = vld [vmem:[#allocation2 + $0x1f8] sm:$0xf]
    %v159 = vld [vmem:[#allocation2 + $0x1fc] sm:$0xf]
    %v160 = vld [vmem:[#allocation2 + $0x200] sm:$0xf]
    %v161 = vld [vmem:[#allocation2 + $0x204] sm:$0xf]
    %v162 = vld [vmem:[#allocation2 + $0x208] sm:$0xf]
    %v163 = vld [vmem:[#allocation2 + $0x20c] sm:$0xf]
    %v164 = vld [vmem:[#allocation2 + $0x210] sm:$0xf]
    %v165 = vld [vmem:[#allocation2 + $0x214] sm:$0xf]
    %v166 = vld [vmem:[#allocation2 + $0x218] sm:$0xf]
    %v167 = vld [vmem:[#allocation2 + $0x21c] sm:$0xf]
    %v168 = vld [vmem:[#allocation2 + $0x220] sm:$0xf]
    %v169 = vld [vmem:[#allocation2 + $0x224] sm:$0xf]
    %v170 = vld [vmem:[#allocation2 + $0x228] sm:$0xf]
    %v171 = vld [vmem:[#allocation2 + $0x22c] sm:$0xf]
    %v172 = vld [vmem:[#allocation2 + $0x230] sm:$0xf]
    %v173 = vld [vmem:[#allocation2 + $0x234] sm:$0xf]
    %v174 = vld [vmem:[#allocation2 + $0x238] sm:$0xf]
    %v175 = vld [vmem:[#allocation2 + $0x23c] sm:$0xf]
    %v176 = vld [vmem:[%s3] sm:$0x1]
    %v177 = vld [vmem:[%s3 + $0x1] sm:$0x1]
    %v178 = vld [vmem:[%s3 + $0x2] sm:$0x1]
    %v179 = vld [vmem:[%s3 + $0x3] sm:$0x1f]
    %v180 = vld [vmem:[%s0] sm:$0xff]
    %v181 = vld [vmem:[%s0 + $0x8] sm:$0xff]
    %v182 = vld [vmem:[%s0 + $0x10] sm:$0xff]
    %v183 = vld [vmem:[%s0 + $0x18] sm:$0xf]
    %v185 = vlaneseq
    %v186 = vshrl.u32 %v185, 7
    %v187 = vsub.s32 0, %v186
    %v188 = vrot.slane %v176, %v187
    %v194 = vunpack.c.l.b16 %v180
    %v195 = vunpack.c.h.b16 %v180
    %v196 = vunpack.c.l.b16 %v181
    %v197 = vunpack.c.h.b16 %v181
    %v198 = vunpack.c.l.b16 %v182
    %v199 = vunpack.c.h.b16 %v182
    %v200 = vunpack.c.l.b16 %v183
    %v201 = vpack.c.b16 %v194, %v194
    %v202 = vpack.c.b16 %v195, %v195
    %v203 = vpack.c.b16 %v196, %v196
    %v204 = vpack.c.b16 %v197, %v197
    %v205 = vpack.c.b16 %v198, %v198
    %v206 = vpack.c.b16 %v199, %v199
    %v207 = vpack.c.b16 %v200, %v200
    %v327 = vunpack.c.l.b16 %v32
    %v328 = vunpack.c.l.b16 %v33
    %v329 = vunpack.c.l.b16 %v34
    %v330 = vunpack.c.l.b16 %v35
    %v331 = vunpack.c.l.b16 %v36
    %v332 = vunpack.c.l.b16 %v37
    %v333 = vunpack.c.l.b16 %v38
    %v334 = vunpack.c.l.b16 %v39
    %v335 = vunpack.c.l.b16 %v40
    %v336 = vunpack.c.l.b16 %v41
    %v337 = vunpack.c.l.b16 %v42
    %v338 = vunpack.c.l.b16 %v43
    %v339 = vunpack.c.l.b16 %v44
    %v340 = vunpack.c.l.b16 %v45
    %v341 = vunpack.c.l.b16 %v46
    %v342 = vunpack.c.l.b16 %v47
    %v343 = vunpack.c.l.b16 %v48
    %v344 = vunpack.c.l.b16 %v49
    %v345 = vunpack.c.l.b16 %v50
    %v346 = vunpack.c.l.b16 %v51
    %v347 = vunpack.c.l.b16 %v52
    %v348 = vunpack.c.l.b16 %v53
    %v349 = vunpack.c.l.b16 %v54
    %v350 = vunpack.c.l.b16 %v55
    %v351 = vunpack.c.l.b16 %v56
    %v352 = vunpack.c.l.b16 %v57
    %v353 = vunpack.c.l.b16 %v58
    %v354 = vunpack.c.l.b16 %v59
    %v355 = vunpack.c.l.b16 %v60
    %v356 = vunpack.c.l.b16 %v61
    %v357 = vunpack.c.l.b16 %v62
    %v358 = vunpack.c.l.b16 %v63
    %v359 = vunpack.c.l.b16 %v64
    %v360 = vunpack.c.l.b16 %v65
    %v361 = vunpack.c.l.b16 %v66
    %v362 = vunpack.c.l.b16 %v67
    %v363 = vunpack.c.l.b16 %v68
    %v364 = vunpack.c.l.b16 %v69
    %v365 = vunpack.c.l.b16 %v70
    %v366 = vunpack.c.l.b16 %v71
    %v367 = vunpack.c.l.b16 %v72
    %v368 = vunpack.c.l.b16 %v73
    %v369 = vunpack.c.l.b16 %v74
    %v370 = vunpack.c.l.b16 %v75
    %v371 = vunpack.c.l.b16 %v76
    %v372 = vunpack.c.l.b16 %v77
    %v373 = vunpack.c.l.b16 %v78
    %v374 = vunpack.c.l.b16 %v79
    %v375 = vunpack.c.l.b16 %v80
    %v376 = vunpack.c.l.b16 %v81
    %v377 = vunpack.c.l.b16 %v82
    %v378 = vunpack.c.l.b16 %v83
    %v379 = vunpack.c.l.b16 %v84
    %v380 = vunpack.c.l.b16 %v85
    %v381 = vunpack.c.l.b16 %v86
    %v382 = vunpack.c.l.b16 %v87
    %v383 = vunpack.c.l.b16 %v88
    %v384 = vunpack.c.l.b16 %v89
    %v385 = vunpack.c.l.b16 %v90
    %v386 = vunpack.c.l.b16 %v91
    %v387 = vunpack.c.l.b16 %v92
    %v388 = vunpack.c.l.b16 %v93
    %v389 = vunpack.c.l.b16 %v94
    %v390 = vunpack.c.l.b16 %v95
    %v391 = vunpack.c.l.b16 %v96
    %v392 = vunpack.c.l.b16 %v97
    %v393 = vunpack.c.l.b16 %v98
    %v394 = vunpack.c.l.b16 %v99
    %v395 = vunpack.c.l.b16 %v100
    %v396 = vunpack.c.l.b16 %v101
    %v397 = vunpack.c.l.b16 %v102
    %v398 = vunpack.c.l.b16 %v103
    %v399 = vunpack.c.l.b16 %v104
    %v400 = vunpack.c.l.b16 %v105
    %v401 = vunpack.c.l.b16 %v106
    %v402 = vunpack.c.l.b16 %v107
    %v403 = vunpack.c.l.b16 %v108
    %v404 = vunpack.c.l.b16 %v109
    %v405 = vunpack.c.l.b16 %v110
    %v406 = vunpack.c.l.b16 %v111
    %v407 = vunpack.c.l.b16 %v112
    %v408 = vunpack.c.l.b16 %v113
    %v409 = vunpack.c.l.b16 %v114
    %v410 = vunpack.c.l.b16 %v115
    %v411 = vunpack.c.l.b16 %v116
    %v412 = vunpack.c.l.b16 %v117
    %v413 = vunpack.c.l.b16 %v118
    %v414 = vunpack.c.l.b16 %v119
    %v415 = vunpack.c.l.b16 %v120
    %v416 = vunpack.c.l.b16 %v121
    %v417 = vunpack.c.l.b16 %v122
    %v418 = vunpack.c.l.b16 %v123
    %v419 = vunpack.c.l.b16 %v124
    %v420 = vunpack.c.l.b16 %v125
    %v421 = vunpack.c.l.b16 %v126
    %v422 = vunpack.c.l.b16 %v127
    %v423 = vunpack.c.l.b16 %v128
    %v424 = vunpack.c.l.b16 %v129
    %v425 = vunpack.c.l.b16 %v130
    %v426 = vunpack.c.l.b16 %v131
    %v427 = vunpack.c.l.b16 %v132
    %v428 = vunpack.c.l.b16 %v133
    %v429 = vunpack.c.l.b16 %v134
    %v430 = vunpack.c.l.b16 %v135
    %v431 = vunpack.c.l.b16 %v136
    %v432 = vunpack.c.l.b16 %v137
    %v433 = vunpack.c.l.b16 %v138
    %v434 = vunpack.c.l.b16 %v139
    %v435 = vunpack.c.l.b16 %v140
    %v436 = vunpack.c.l.b16 %v141
    %v437 = vunpack.c.l.b16 %v142
    %v438 = vunpack.c.l.b16 %v143
    %v439 = vpack.c.b16 %v328, %v327
    %v440 = vpack.c.b16 %v330, %v329
    %v441 = vpack.c.b16 %v332, %v331
    %v442 = vpack.c.b16 %v334, %v333
    %v443 = vpack.c.b16 %v336, %v335
    %v444 = vpack.c.b16 %v338, %v337
    %v445 = vpack.c.b16 %v340, %v339
    %v446 = vpack.c.b16 %v342, %v341
    %v447 = vpack.c.b16 %v344, %v343
    %v448 = vpack.c.b16 %v346, %v345
    %v449 = vpack.c.b16 %v348, %v347
    %v450 = vpack.c.b16 %v350, %v349
    %v451 = vpack.c.b16 %v352, %v351
    %v452 = vpack.c.b16 %v354, %v353
    %v453 = vpack.c.b16 %v356, %v355
    %v454 = vpack.c.b16 %v358, %v357
    %v455 = vpack.c.b16 %v360, %v359
    %v456 = vpack.c.b16 %v362, %v361
    %v457 = vpack.c.b16 %v364, %v363
    %v458 = vpack.c.b16 %v366, %v365
    %v459 = vpack.c.b16 %v368, %v367
    %v460 = vpack.c.b16 %v370, %v369
    %v461 = vpack.c.b16 %v372, %v371
    %v462 = vpack.c.b16 %v374, %v373
    %v463 = vpack.c.b16 %v376, %v375
    %v464 = vpack.c.b16 %v378, %v377
    %v465 = vpack.c.b16 %v380, %v379
    %v466 = vpack.c.b16 %v382, %v381
    %v467 = vpack.c.b16 %v384, %v383
    %v468 = vpack.c.b16 %v386, %v385
    %v469 = vpack.c.b16 %v388, %v387
    %v470 = vpack.c.b16 %v390, %v389
    %v471 = vpack.c.b16 %v392, %v391
    %v472 = vpack.c.b16 %v394, %v393
    %v473 = vpack.c.b16 %v396, %v395
    %v474 = vpack.c.b16 %v398, %v397
    %v475 = vpack.c.b16 %v400, %v399
    %v476 = vpack.c.b16 %v402, %v401
    %v477 = vpack.c.b16 %v404, %v403
    %v478 = vpack.c.b16 %v406, %v405
    %v479 = vpack.c.b16 %v408, %v407
    %v480 = vpack.c.b16 %v410, %v409
    %v481 = vpack.c.b16 %v412, %v411
    %v482 = vpack.c.b16 %v414, %v413
    %v483 = vpack.c.b16 %v416, %v415
    %v484 = vpack.c.b16 %v418, %v417
    %v485 = vpack.c.b16 %v420, %v419
    %v486 = vpack.c.b16 %v422, %v421
    %v487 = vpack.c.b16 %v424, %v423
    %v488 = vpack.c.b16 %v426, %v425
    %v489 = vpack.c.b16 %v428, %v427
    %v490 = vpack.c.b16 %v430, %v429
    %v491 = vpack.c.b16 %v432, %v431
    %v492 = vpack.c.b16 %v434, %v433
    %v493 = vpack.c.b16 %v436, %v435
    %v494 = vpack.c.b16 %v438, %v437
    %551 = vmatprep.subr.bf16.mxu0 0
    %552 = vmatpush1.bf16.msra.mxu0 %v439
    %553 = vmatprep.subr.bf16.mxu0 0
    %554 = vmatpush1.bf16.msra.mxu0 %v440
    %555 = vmatprep.subr.bf16.mxu0 0
    %556 = vmatpush1.bf16.msra.mxu0 %v441
    %557 = vmatprep.subr.bf16.mxu0 0
    %558 = vmatpush1.bf16.msra.mxu0 %v442
    %559 = vmatprep.subr.bf16.mxu0 0
    %560 = vmatpush1.bf16.msra.mxu0 %v443
    %561 = vmatprep.subr.bf16.mxu0 0
    %562 = vmatpush1.bf16.msra.mxu0 %v444
    %563 = vmatprep.subr.bf16.mxu0 0
    %564 = vmatpush1.bf16.msra.mxu0 %v445
    %565 = vmatprep.subr.bf16.mxu0 0
    %566 = vmatpush1.bf16.msra.mxu0 %v446
    %567 = vmatprep.subr.bf16.mxu0 0
    %568 = vmatpush1.bf16.msra.mxu0 %v447
    %569 = vmatprep.subr.bf16.mxu0 0
    %570 = vmatpush1.bf16.msra.mxu0 %v448
    %571 = vmatprep.subr.bf16.mxu0 0
    %572 = vmatpush1.bf16.msra.mxu0 %v449
    %573 = vmatprep.subr.bf16.mxu0 0
    %574 = vmatpush1.bf16.msra.mxu0 %v450
    %575 = vmatprep.subr.bf16.mxu0 0
    %576 = vmatpush1.bf16.msra.mxu0 %v451
    %577 = vmatprep.subr.bf16.mxu0 0
    %578 = vmatpush1.bf16.msra.mxu0 %v452
    %579 = vmatprep.subr.bf16.mxu0 0
    %580 = vmatpush1.bf16.msra.mxu0 %v453
    %581 = vmatprep.subr.bf16.mxu0 0
    %582 = vmatpush1.bf16.msra.mxu0 %v454
    %583 = vmatprep.mubr.bf16.mxu0 %v202
    %584 = vmatmul.mubr.bf16.gmra.mrb[0].mxu0 %v201
    %v585 = vpop.f32.mrb[0].mxu0
    %v586 = vadd.f32 %v188, %v585
    %v587 = vpop.f32.mrb[0].mxu0
    %v588 = vpop.f32.mrb[0].mxu0
    %v589 = vpop.f32.mrb[0].mxu0
    %590 = vdwg.mxu0
    %591 = vmatprep.subr.bf16.mxu0 0
    %592 = vmatpush1.bf16.msra.mxu0 %v455
    %593 = vmatprep.subr.bf16.mxu0 0
    %594 = vmatpush1.bf16.msra.mxu0 %v456
    %595 = vmatprep.subr.bf16.mxu0 0
    %596 = vmatpush1.bf16.msra.mxu0 %v457
    %597 = vmatprep.subr.bf16.mxu0 0
    %598 = vmatpush1.bf16.msra.mxu0 %v458
    %599 = vmatprep.subr.bf16.mxu0 0
    %600 = vmatpush1.bf16.msra.mxu0 %v459
    %601 = vmatprep.subr.bf16.mxu0 0
    %602 = vmatpush1.bf16.msra.mxu0 %v460
    %603 = vmatprep.subr.bf16.mxu0 0
    %604 = vmatpush1.bf16.msra.mxu0 %v461
    %605 = vmatprep.subr.bf16.mxu0 0
    %606 = vmatpush1.bf16.msra.mxu0 %v462
    %607 = vmatprep.subr.bf16.mxu0 0
    %608 = vmatpush1.bf16.msra.mxu0 %v463
    %609 = vmatprep.subr.bf16.mxu0 0
    %610 = vmatpush1.bf16.msra.mxu0 %v464
    %611 = vmatprep.subr.bf16.mxu0 0
    %612 = vmatpush1.bf16.msra.mxu0 %v465
    %613 = vmatprep.subr.bf16.mxu0 0
    %614 = vmatpush1.bf16.msra.mxu0 %v466
    %615 = vmatprep.subr.bf16.mxu0 0
    %616 = vmatpush1.bf16.msra.mxu0 %v467
    %617 = vmatprep.subr.bf16.mxu0 0
    %618 = vmatpush1.bf16.msra.mxu0 %v468
    %619 = vmatprep.subr.bf16.mxu0 0
    %620 = vmatpush1.bf16.msra.mxu0 %v469
    %621 = vmatprep.subr.bf16.mxu0 0
    %622 = vmatpush1.bf16.msra.mxu0 %v470
    %623 = vmatprep.mubr.bf16.mxu0 %v204
    %624 = vmatmul.mubr.bf16.gmra.mrb[0].mxu0 %v203
    %v625 = vpop.f32.mrb[0].mxu0
    %v626 = vadd.f32 %v586, %v625
    %v627 = vpop.f32.mrb[0].mxu0
    %v628 = vpop.f32.mrb[0].mxu0
    %v629 = vpop.f32.mrb[0].mxu0
    %630 = vdwg.mxu0
    %631 = vmatprep.subr.bf16.mxu0 0
    %632 = vmatpush1.bf16.msra.mxu0 %v471
    %633 = vmatprep.subr.bf16.mxu0 0
    %634 = vmatpush1.bf16.msra.mxu0 %v472
    %635 = vmatprep.subr.bf16.mxu0 0
    %636 = vmatpush1.bf16.msra.mxu0 %v473
    %637 = vmatprep.subr.bf16.mxu0 0
    %638 = vmatpush1.bf16.msra.mxu0 %v474
    %639 = vmatprep.subr.bf16.mxu0 0
    %640 = vmatpush1.bf16.msra.mxu0 %v475
    %641 = vmatprep.subr.bf16.mxu0 0
    %642 = vmatpush1.bf16.msra.mxu0 %v476
    %643 = vmatprep.subr.bf16.mxu0 0
    %644 = vmatpush1.bf16.msra.mxu0 %v477
    %645 = vmatprep.subr.bf16.mxu0 0
    %646 = vmatpush1.bf16.msra.mxu0 %v478
    %647 = vmatprep.subr.bf16.mxu0 0
    %648 = vmatpush1.bf16.msra.mxu0 %v479
    %649 = vmatprep.subr.bf16.mxu0 0
    %650 = vmatpush1.bf16.msra.mxu0 %v480
    %651 = vmatprep.subr.bf16.mxu0 0
    %652 = vmatpush1.bf16.msra.mxu0 %v481
    %653 = vmatprep.subr.bf16.mxu0 0
    %654 = vmatpush1.bf16.msra.mxu0 %v482
    %655 = vmatprep.subr.bf16.mxu0 0
    %656 = vmatpush1.bf16.msra.mxu0 %v483
    %657 = vmatprep.subr.bf16.mxu0 0
    %658 = vmatpush1.bf16.msra.mxu0 %v484
    %659 = vmatprep.subr.bf16.mxu0 0
    %660 = vmatpush1.bf16.msra.mxu0 %v485
    %661 = vmatprep.subr.bf16.mxu0 0
    %662 = vmatpush1.bf16.msra.mxu0 %v486
    %663 = vmatprep.mubr.bf16.mxu0 %v206
    %664 = vmatmul.mubr.bf16.gmra.mrb[0].mxu0 %v205
    %v665 = vpop.f32.mrb[0].mxu0
    %v666 = vadd.f32 %v626, %v665
    %v667 = vpop.f32.mrb[0].mxu0
    %v668 = vpop.f32.mrb[0].mxu0
    %v669 = vpop.f32.mrb[0].mxu0
    %670 = vdwg.mxu0
    %671 = vmatprep.subr.bf16.mxu0 0
    %672 = vmatpush1.bf16.msra.mxu0 %v487
    %673 = vmatprep.subr.bf16.mxu0 0
    %674 = vmatpush1.bf16.msra.mxu0 %v488
    %675 = vmatprep.subr.bf16.mxu0 0
    %676 = vmatpush1.bf16.msra.mxu0 %v489
    %677 = vmatprep.subr.bf16.mxu0 0
    %678 = vmatpush1.bf16.msra.mxu0 %v490
    %679 = vmatprep.subr.bf16.mxu0 0
    %680 = vmatpush1.bf16.msra.mxu0 %v491
    %681 = vmatprep.subr.bf16.mxu0 0
    %682 = vmatpush1.bf16.msra.mxu0 %v492
    %683 = vmatprep.subr.bf16.mxu0 0
    %684 = vmatpush1.bf16.msra.mxu0 %v493
    %685 = vmatprep.subr.bf16.mxu0 0
    %686 = vmatpush1.bf16.msra.mxu0 %v494
    %687 = vmatprep.subr.bf16.mxu0 0
    %688 = vmatpush1.bf16.msra.mxu0 0
    %689 = vmatprep.subr.bf16.mxu0 0
    %690 = vmatpush1.bf16.msra.mxu0 0
    %691 = vmatprep.subr.bf16.mxu0 0
    %692 = vmatpush1.bf16.msra.mxu0 0
    %693 = vmatprep.subr.bf16.mxu0 0
    %694 = vmatpush1.bf16.msra.mxu0 0
    %695 = vmatprep.subr.bf16.mxu0 0
    %696 = vmatpush1.bf16.msra.mxu0 0
    %697 = vmatprep.subr.bf16.mxu0 0
    %698 = vmatpush1.bf16.msra.mxu0 0
    %699 = vmatprep.subr.bf16.mxu0 0
    %700 = vmatpush1.bf16.msra.mxu0 0
    %701 = vmatprep.subr.bf16.mxu0 0
    %702 = vmatpush1.bf16.msra.mxu0 0
    %703 = vmatprep.mubr.bf16.mxu0 0
    %704 = vmatmul.mubr.bf16.gmra.mrb[0].mxu0 %v207
    %v705 = vpop.f32.mrb[0].mxu0
    %v706 = vadd.f32 %v666, %v705
    %v707 = vpop.f32.mrb[0].mxu0
    %v708 = vpop.f32.mrb[0].mxu0
    %v709 = vpop.f32.mrb[0].mxu0
    %710 = vdwg.mxu0
    %v711 = vmax.f32 %v706, 0.0
    %v712 = vpack.c.bf16 %v711, %v711
    %v714 = vlaneseq
    %v715 = vshrl.u32 %v714, 7
    %v716 = vsub.s32 0, %v715
    %v717 = vrot.slane %v177, %v716
    %v735 = vunpack.c.l.b16 %v144
    %v736 = vunpack.c.l.b16 %v145
    %v737 = vunpack.c.l.b16 %v146
    %v738 = vunpack.c.l.b16 %v147
    %v739 = vunpack.c.l.b16 %v148
    %v740 = vunpack.c.l.b16 %v149
    %v741 = vunpack.c.l.b16 %v150
    %v742 = vunpack.c.l.b16 %v151
    %v743 = vunpack.c.l.b16 %v152
    %v744 = vunpack.c.l.b16 %v153
    %v745 = vunpack.c.l.b16 %v154
    %v746 = vunpack.c.l.b16 %v155
    %v747 = vunpack.c.l.b16 %v156
    %v748 = vunpack.c.l.b16 %v157
    %v749 = vunpack.c.l.b16 %v158
    %v750 = vunpack.c.l.b16 %v159
    %v751 = vpack.c.b16 %v736, %v735
    %v752 = vpack.c.b16 %v738, %v737
    %v753 = vpack.c.b16 %v740, %v739
    %v754 = vpack.c.b16 %v742, %v741
    %v755 = vpack.c.b16 %v744, %v743
    %v756 = vpack.c.b16 %v746, %v745
    %v757 = vpack.c.b16 %v748, %v747
    %v758 = vpack.c.b16 %v750, %v749
    %767 = vmatprep.subr.bf16.mxu0 0
    %768 = vmatpush1.bf16.msra.mxu0 %v751
    %769 = vmatprep.subr.bf16.mxu0 0
    %770 = vmatpush1.bf16.msra.mxu0 %v752
    %771 = vmatprep.subr.bf16.mxu0 0
    %772 = vmatpush1.bf16.msra.mxu0 %v753
    %773 = vmatprep.subr.bf16.mxu0 0
    %774 = vmatpush1.bf16.msra.mxu0 %v754
    %775 = vmatprep.subr.bf16.mxu0 0
    %776 = vmatpush1.bf16.msra.mxu0 %v755
    %777 = vmatprep.subr.bf16.mxu0 0
    %778 = vmatpush1.bf16.msra.mxu0 %v756
    %779 = vmatprep.subr.bf16.mxu0 0
    %780 = vmatpush1.bf16.msra.mxu0 %v757
    %781 = vmatprep.subr.bf16.mxu0 0
    %782 = vmatpush1.bf16.msra.mxu0 %v758
    %783 = vmatprep.subr.bf16.mxu0 0
    %784 = vmatpush1.bf16.msra.mxu0 0
    %785 = vmatprep.subr.bf16.mxu0 0
    %786 = vmatpush1.bf16.msra.mxu0 0
    %787 = vmatprep.subr.bf16.mxu0 0
    %788 = vmatpush1.bf16.msra.mxu0 0
    %789 = vmatprep.subr.bf16.mxu0 0
    %790 = vmatpush1.bf16.msra.mxu0 0
    %791 = vmatprep.subr.bf16.mxu0 0
    %792 = vmatpush1.bf16.msra.mxu0 0
    %793 = vmatprep.subr.bf16.mxu0 0
    %794 = vmatpush1.bf16.msra.mxu0 0
    %795 = vmatprep.subr.bf16.mxu0 0
    %796 = vmatpush1.bf16.msra.mxu0 0
    %797 = vmatprep.subr.bf16.mxu0 0
    %798 = vmatpush1.bf16.msra.mxu0 0
    %799 = vmatprep.mubr.bf16.mxu0 0
    %800 = vmatmul.mubr.bf16.gmra.mrb[0].mxu0 %v712
    %v801 = vpop.f32.mrb[0].mxu0
    %v802 = vadd.f32 %v717, %v801
    %v803 = vpop.f32.mrb[0].mxu0
    %v804 = vpop.f32.mrb[0].mxu0
    %v805 = vpop.f32.mrb[0].mxu0
    %806 = vdwg.mxu0
    %v807 = vmax.f32 %v802, 0.0
    %v808 = vpack.c.bf16 %v807, %v807
    %v810 = vlaneseq
    %v811 = vshrl.u32 %v810, 7
    %v812 = vsub.s32 0, %v811
    %v813 = vrot.slane %v178, %v812
    %v831 = vunpack.c.l.b16 %v160
    %v832 = vunpack.c.l.b16 %v161
    %v833 = vunpack.c.l.b16 %v162
    %v834 = vunpack.c.l.b16 %v163
    %v835 = vunpack.c.l.b16 %v164
    %v836 = vunpack.c.l.b16 %v165
    %v837 = vunpack.c.l.b16 %v166
    %v838 = vunpack.c.l.b16 %v167
    %v839 = vunpack.c.l.b16 %v168
    %v840 = vunpack.c.l.b16 %v169
    %v841 = vunpack.c.l.b16 %v170
    %v842 = vunpack.c.l.b16 %v171
    %v843 = vunpack.c.l.b16 %v172
    %v844 = vunpack.c.l.b16 %v173
    %v845 = vunpack.c.l.b16 %v174
    %v846 = vunpack.c.l.b16 %v175
    %v847 = vpack.c.b16 %v832, %v831
    %v848 = vpack.c.b16 %v834, %v833
    %v849 = vpack.c.b16 %v836, %v835
    %v850 = vpack.c.b16 %v838, %v837
    %v851 = vpack.c.b16 %v840, %v839
    %v852 = vpack.c.b16 %v842, %v841
    %v853 = vpack.c.b16 %v844, %v843
    %v854 = vpack.c.b16 %v846, %v845
    %863 = vmatprep.subr.bf16.mxu0 0
    %864 = vmatpush1.bf16.msra.mxu0 %v847
    %865 = vmatprep.subr.bf16.mxu0 0
    %866 = vmatpush1.bf16.msra.mxu0 %v848
    %867 = vmatprep.subr.bf16.mxu0 0
    %868 = vmatpush1.bf16.msra.mxu0 %v849
    %869 = vmatprep.subr.bf16.mxu0 0
    %870 = vmatpush1.bf16.msra.mxu0 %v850
    %871 = vmatprep.subr.bf16.mxu0 0
    %872 = vmatpush1.bf16.msra.mxu0 %v851
    %873 = vmatprep.subr.bf16.mxu0 0
    %874 = vmatpush1.bf16.msra.mxu0 %v852
    %875 = vmatprep.subr.bf16.mxu0 0
    %876 = vmatpush1.bf16.msra.mxu0 %v853
    %877 = vmatprep.subr.bf16.mxu0 0
    %878 = vmatpush1.bf16.msra.mxu0 %v854
    %879 = vmatprep.subr.bf16.mxu0 0
    %880 = vmatpush1.bf16.msra.mxu0 0
    %881 = vmatprep.subr.bf16.mxu0 0
    %882 = vmatpush1.bf16.msra.mxu0 0
    %883 = vmatprep.subr.bf16.mxu0 0
    %884 = vmatpush1.bf16.msra.mxu0 0
    %885 = vmatprep.subr.bf16.mxu0 0
    %886 = vmatpush1.bf16.msra.mxu0 0
    %887 = vmatprep.subr.bf16.mxu0 0
    %888 = vmatpush1.bf16.msra.mxu0 0
    %889 = vmatprep.subr.bf16.mxu0 0
    %890 = vmatpush1.bf16.msra.mxu0 0
    %891 = vmatprep.subr.bf16.mxu0 0
    %892 = vmatpush1.bf16.msra.mxu0 0
    %893 = vmatprep.subr.bf16.mxu0 0
    %894 = vmatpush1.bf16.msra.mxu0 0
    %895 = vmatprep.mubr.bf16.mxu0 0
    %896 = vmatmul.mubr.bf16.gmra.mrb[0].mxu0 %v808
    %v897 = vpop.f32.mrb[0].mxu0
    %v898 = vadd.f32 %v813, %v897
    %v899 = vpop.f32.mrb[0].mxu0
    %v900 = vpop.f32.mrb[0].mxu0
    %v901 = vpop.f32.mrb[0].mxu0
    %902 = vdwg.mxu0
    %v903 = vxor.u32 %v898, 2147483648
    %v904 = vmul.f32 %v903, 1.442695
    %v905 = vpow.pop %v904
    %v906 = vadd.f32 %v905, 1.0
    %v907 = vrcp.pop %v906
    %v908 = vmul.f32 1.0, %v907
    %v909 = vpack.c.bf16 %v908, %v908
    %v910 = vld [vmem:[%s2] sm:$0xff]
    %v911 = vld [vmem:[%s2 + $0x8] sm:$0xff]
    %v912 = vld [vmem:[%s2 + $0x10] sm:$0xf]
    %v913 = vld [vmem:[%s2 + $0x14] sm:$0xff]
    %v914 = vld [vmem:[%s2 + $0x1c] sm:$0xff]
    %v915 = vld [vmem:[%s2 + $0x24] sm:$0xf]
    %v916 = vld [vmem:[%s2 + $0x28] sm:$0xff]
    %v917 = vld [vmem:[%s2 + $0x30] sm:$0xff]
    %v918 = vld [vmem:[%s2 + $0x38] sm:$0xf]
    %v919 = vld [vmem:[%s2 + $0x3c] sm:$0xff]
    %v920 = vld [vmem:[%s2 + $0x44] sm:$0xff]
    %v921 = vld [vmem:[%s2 + $0x4c] sm:$0xf]
    %v922 = vld [vmem:[%s2 + $0x50] sm:$0xff]
    %v923 = vld [vmem:[%s2 + $0x58] sm:$0xff]
    %v924 = vld [vmem:[%s2 + $0x60] sm:$0xf]
    %v925 = vld [vmem:[%s2 + $0x64] sm:$0xff]
    %v926 = vld [vmem:[%s2 + $0x6c] sm:$0xff]
    %v927 = vld [vmem:[%s2 + $0x74] sm:$0xf]
    %v928 = vld [vmem:[%s2 + $0x78] sm:$0xff]
    %v929 = vld [vmem:[%s2 + $0x80] sm:$0xff]
    %v930 = vld [vmem:[%s2 + $0x88] sm:$0xf]
    %v931 = vld [vmem:[%s2 + $0x8c] sm:$0xff]
    %v932 = vld [vmem:[%s2 + $0x94] sm:$0xff]
    %v933 = vld [vmem:[%s2 + $0x9c] sm:$0xf]
    %v934 = vld [vmem:[%s2 + $0xa0] sm:$0xff]
    %v935 = vld [vmem:[%s2 + $0xa8] sm:$0xff]
    %v936 = vld [vmem:[%s2 + $0xb0] sm:$0xf]
    %v937 = vld [vmem:[%s2 + $0xb4] sm:$0xff]
    %v938 = vld [vmem:[%s2 + $0xbc] sm:$0xff]
    %v939 = vld [vmem:[%s2 + $0xc4] sm:$0xf]
    %v940 = vld [vmem:[%s2 + $0xc8] sm:$0xff]
    %v941 = vld [vmem:[%s2 + $0xd0] sm:$0xff]
    %v942 = vld [vmem:[%s2 + $0xd8] sm:$0xf]
    %v943 = vld [vmem:[%s2 + $0xdc] sm:$0xff]
    %v944 = vld [vmem:[%s2 + $0xe4] sm:$0xff]
    %v945 = vld [vmem:[%s2 + $0xec] sm:$0xf]
    %v946 = vld [vmem:[%s2 + $0xf0] sm:$0xff]
    %v947 = vld [vmem:[%s2 + $0xf8] sm:$0xff]
    %v948 = vld [vmem:[%s2 + $0x100] sm:$0xf]
    %v949 = vld [vmem:[%s2 + $0x104] sm:$0xff]
    %v950 = vld [vmem:[%s2 + $0x10c] sm:$0xff]
    %v951 = vld [vmem:[%s2 + $0x114] sm:$0xf]
    %v952 = vld [vmem:[%s2 + $0x118] sm:$0xff]
    %v953 = vld [vmem:[%s2 + $0x120] sm:$0xff]
    %v954 = vld [vmem:[%s2 + $0x128] sm:$0xf]
    %v955 = vld [vmem:[%s2 + $0x12c] sm:$0xff]
    %v956 = vld [vmem:[%s2 + $0x134] sm:$0xff]
    %v957 = vld [vmem:[%s2 + $0x13c] sm:$0xf]
    %v959 = vlaneseq
    %v960 = vshrl.u32 %v959, 7
    %v961 = vsub.s32 0, %v960
    %v962 = vrot.slane %v179, %v961
    %v963 = vlaneseq
    %v964 = vshrl.u32 %v963, 7
    %v965 = vsub.s32 1, %v964
    %v966 = vrot.slane %v179, %v965
    %v967 = vlaneseq
    %v968 = vshrl.u32 %v967, 7
    %v969 = vsub.s32 2, %v968
    %v970 = vrot.slane %v179, %v969
    %v971 = vlaneseq
    %v972 = vshrl.u32 %v971, 7
    %v973 = vsub.s32 3, %v972
    %v974 = vrot.slane %v179, %v973
    %v975 = vlaneseq
    %v976 = vshrl.u32 %v975, 7
    %v977 = vsub.s32 4, %v976
    %v978 = vrot.slane %v179, %v977
    %v1032 = vunpack.c.l.b16 %v910
    %v1033 = vunpack.c.h.b16 %v910
    %v1034 = vunpack.c.l.b16 %v911
    %v1035 = vunpack.c.h.b16 %v911
    %v1036 = vunpack.c.l.b16 %v912
    %v1037 = vunpack.c.l.b16 %v913
    %v1038 = vunpack.c.h.b16 %v913
    %v1039 = vunpack.c.l.b16 %v914
    %v1040 = vunpack.c.h.b16 %v914
    %v1041 = vunpack.c.l.b16 %v915
    %v1042 = vunpack.c.l.b16 %v916
    %v1043 = vunpack.c.h.b16 %v916
    %v1044 = vunpack.c.l.b16 %v917
    %v1045 = vunpack.c.h.b16 %v917
    %v1046 = vunpack.c.l.b16 %v918
    %v1047 = vunpack.c.l.b16 %v919
    %v1048 = vunpack.c.h.b16 %v919
    %v1049 = vunpack.c.l.b16 %v920
    %v1050 = vunpack.c.h.b16 %v920
    %v1051 = vunpack.c.l.b16 %v921
    %v1052 = vunpack.c.l.b16 %v922
    %v1053 = vunpack.c.h.b16 %v922
    %v1054 = vunpack.c.l.b16 %v923
    %v1055 = vunpack.c.h.b16 %v923
    %v1056 = vunpack.c.l.b16 %v924
    %v1057 = vunpack.c.l.b16 %v925
    %v1058 = vunpack.c.h.b16 %v925
    %v1059 = vunpack.c.l.b16 %v926
    %v1060 = vunpack.c.h.b16 %v926
    %v1061 = vunpack.c.l.b16 %v927
    %v1062 = vunpack.c.l.b16 %v928
    %v1063 = vunpack.c.h.b16 %v928
    %v1064 = vunpack.c.l.b16 %v929
    %v1065 = vunpack.c.h.b16 %v929
    %v1066 = vunpack.c.l.b16 %v930
    %v1067 = vunpack.c.l.b16 %v931
    %v1068 = vunpack.c.h.b16 %v931
    %v1069 = vunpack.c.l.b16 %v932
    %v1070 = vunpack.c.h.b16 %v932
    %v1071 = vunpack.c.l.b16 %v933
    %v1072 = vunpack.c.l.b16 %v934
    %v1073 = vunpack.c.h.b16 %v934
    %v1074 = vunpack.c.l.b16 %v935
    %v1075 = vunpack.c.h.b16 %v935
    %v1076 = vunpack.c.l.b16 %v936
    %v1077 = vunpack.c.l.b16 %v937
    %v1078 = vunpack.c.h.b16 %v937
    %v1079 = vunpack.c.l.b16 %v938
    %v1080 = vunpack.c.h.b16 %v938
    %v1081 = vunpack.c.l.b16 %v939
    %v1082 = vunpack.c.l.b16 %v940
    %v1083 = vunpack.c.h.b16 %v940
    %v1084 = vunpack.c.l.b16 %v941
    %v1085 = vunpack.c.h.b16 %v941
    %v1086 = vunpack.c.l.b16 %v942
    %v1087 = vunpack.c.l.b16 %v943
    %v1088 = vunpack.c.h.b16 %v943
    %v1089 = vunpack.c.l.b16 %v944
    %v1090 = vunpack.c.h.b16 %v944
    %v1091 = vunpack.c.l.b16 %v945
    %v1092 = vunpack.c.l.b16 %v946
    %v1093 = vunpack.c.h.b16 %v946
    %v1094 = vunpack.c.l.b16 %v947
    %v1095 = vunpack.c.h.b16 %v947
    %v1096 = vunpack.c.l.b16 %v948
    %v1097 = vunpack.c.l.b16 %v949
    %v1098 = vunpack.c.h.b16 %v949
    %v1099 = vunpack.c.l.b16 %v950
    %v1100 = vunpack.c.h.b16 %v950
    %v1101 = vunpack.c.l.b16 %v951
    %v1102 = vunpack.c.l.b16 %v952
    %v1103 = vunpack.c.h.b16 %v952
    %v1104 = vunpack.c.l.b16 %v953
    %v1105 = vunpack.c.h.b16 %v953
    %v1106 = vunpack.c.l.b16 %v954
    %v1107 = vunpack.c.l.b16 %v955
    %v1108 = vunpack.c.h.b16 %v955
    %v1109 = vunpack.c.l.b16 %v956
    %v1110 = vunpack.c.h.b16 %v956
    %v1111 = vunpack.c.l.b16 %v957
    %v1112 = vpack.c.b16 %v1037, %v1032
    %v1113 = vpack.c.b16 %v1038, %v1033
    %v1114 = vpack.c.b16 %v1039, %v1034
    %v1115 = vpack.c.b16 %v1040, %v1035
    %v1116 = vpack.c.b16 %v1041, %v1036
    %v1117 = vpack.c.b16 %v1047, %v1042
    %v1118 = vpack.c.b16 %v1048, %v1043
    %v1119 = vpack.c.b16 %v1049, %v1044
    %v1120 = vpack.c.b16 %v1050, %v1045
    %v1121 = vpack.c.b16 %v1051, %v1046
    %v1122 = vpack.c.b16 %v1057, %v1052
    %v1123 = vpack.c.b16 %v1058, %v1053
    %v1124 = vpack.c.b16 %v1059, %v1054
    %v1125 = vpack.c.b16 %v1060, %v1055
    %v1126 = vpack.c.b16 %v1061, %v1056
    %v1127 = vpack.c.b16 %v1067, %v1062
    %v1128 = vpack.c.b16 %v1068, %v1063
    %v1129 = vpack.c.b16 %v1069, %v1064
    %v1130 = vpack.c.b16 %v1070, %v1065
    %v1131 = vpack.c.b16 %v1071, %v1066
    %v1132 = vpack.c.b16 %v1077, %v1072
    %v1133 = vpack.c.b16 %v1078, %v1073
    %v1134 = vpack.c.b16 %v1079, %v1074
    %v1135 = vpack.c.b16 %v1080, %v1075
    %v1136 = vpack.c.b16 %v1081, %v1076
    %v1137 = vpack.c.b16 %v1087, %v1082
    %v1138 = vpack.c.b16 %v1088, %v1083
    %v1139 = vpack.c.b16 %v1089, %v1084
    %v1140 = vpack.c.b16 %v1090, %v1085
    %v1141 = vpack.c.b16 %v1091, %v1086
    %v1142 = vpack.c.b16 %v1097, %v1092
    %v1143 = vpack.c.b16 %v1098, %v1093
    %v1144 = vpack.c.b16 %v1099, %v1094
    %v1145 = vpack.c.b16 %v1100, %v1095
    %v1146 = vpack.c.b16 %v1101, %v1096
    %v1147 = vpack.c.b16 %v1107, %v1102
    %v1148 = vpack.c.b16 %v1108, %v1103
    %v1149 = vpack.c.b16 %v1109, %v1104
    %v1150 = vpack.c.b16 %v1110, %v1105
    %v1151 = vpack.c.b16 %v1111, %v1106
    %1192 = vmatprep.subr.bf16.mxu0 %v1113
    %1193 = vmatpush1.bf16.msra.mxu0 %v1112
    %1194 = vmatprep.subr.bf16.mxu0 %v1118
    %1195 = vmatpush1.bf16.msra.mxu0 %v1117
    %1196 = vmatprep.subr.bf16.mxu0 %v1123
    %1197 = vmatpush1.bf16.msra.mxu0 %v1122
    %1198 = vmatprep.subr.bf16.mxu0 %v1128
    %1199 = vmatpush1.bf16.msra.mxu0 %v1127
    %1200 = vmatprep.subr.bf16.mxu0 %v1133
    %1201 = vmatpush1.bf16.msra.mxu0 %v1132
    %1202 = vmatprep.subr.bf16.mxu0 %v1138
    %1203 = vmatpush1.bf16.msra.mxu0 %v1137
    %1204 = vmatprep.subr.bf16.mxu0 %v1143
    %1205 = vmatpush1.bf16.msra.mxu0 %v1142
    %1206 = vmatprep.subr.bf16.mxu0 %v1148
    %1207 = vmatpush1.bf16.msra.mxu0 %v1147
    %1208 = vmatprep.subr.bf16.mxu0 0
    %1209 = vmatpush1.bf16.msra.mxu0 0
    %1210 = vmatprep.subr.bf16.mxu0 0
    %1211 = vmatpush1.bf16.msra.mxu0 0
    %1212 = vmatprep.subr.bf16.mxu0 0
    %1213 = vmatpush1.bf16.msra.mxu0 0
    %1214 = vmatprep.subr.bf16.mxu0 0
    %1215 = vmatpush1.bf16.msra.mxu0 0
    %1216 = vmatprep.subr.bf16.mxu0 0
    %1217 = vmatpush1.bf16.msra.mxu0 0
    %1218 = vmatprep.subr.bf16.mxu0 0
    %1219 = vmatpush1.bf16.msra.mxu0 0
    %1220 = vmatprep.subr.bf16.mxu0 0
    %1221 = vmatpush1.bf16.msra.mxu0 0
    %1222 = vmatprep.subr.bf16.mxu0 0
    %1223 = vmatpush1.bf16.msra.mxu0 0
    %1224 = vmatprep.mubr.bf16.mxu0 0
    %1225 = vmatmul.mubr.bf16.gmra.mrb[0].mxu0 %v909
    %v1226 = vpop.f32.mrb[0].mxu0
    %v1227 = vadd.f32 %v962, %v1226
    %v1228 = vpop.f32.mrb[0].mxu0
    %v1229 = vadd.f32 %v966, %v1228
    %v1230 = vpop.f32.mrb[0].mxu0
    %v1231 = vpop.f32.mrb[0].mxu0
    %1232 = vdwg.mxu0
    %1233 = vmatprep.subr.bf16.mxu0 %v1115
    %1234 = vmatpush1.bf16.msra.mxu0 %v1114
    %1235 = vmatprep.subr.bf16.mxu0 %v1120
    %1236 = vmatpush1.bf16.msra.mxu0 %v1119
    %1237 = vmatprep.subr.bf16.mxu0 %v1125
    %1238 = vmatpush1.bf16.msra.mxu0 %v1124
    %1239 = vmatprep.subr.bf16.mxu0 %v1130
    %1240 = vmatpush1.bf16.msra.mxu0 %v1129
    %1241 = vmatprep.subr.bf16.mxu0 %v1135
    %1242 = vmatpush1.bf16.msra.mxu0 %v1134
    %1243 = vmatprep.subr.bf16.mxu0 %v1140
    %1244 = vmatpush1.bf16.msra.mxu0 %v1139
    %1245 = vmatprep.subr.bf16.mxu0 %v1145
    %1246 = vmatpush1.bf16.msra.mxu0 %v1144
    %1247 = vmatprep.subr.bf16.mxu0 %v1150
    %1248 = vmatpush1.bf16.msra.mxu0 %v1149
    %1249 = vmatprep.subr.bf16.mxu0 0
    %1250 = vmatpush1.bf16.msra.mxu0 0
    %1251 = vmatprep.subr.bf16.mxu0 0
    %1252 = vmatpush1.bf16.msra.mxu0 0
    %1253 = vmatprep.subr.bf16.mxu0 0
    %1254 = vmatpush1.bf16.msra.mxu0 0
    %1255 = vmatprep.subr.bf16.mxu0 0
    %1256 = vmatpush1.bf16.msra.mxu0 0
    %1257 = vmatprep.subr.bf16.mxu0 0
    %1258 = vmatpush1.bf16.msra.mxu0 0
    %1259 = vmatprep.subr.bf16.mxu0 0
    %1260 = vmatpush1.bf16.msra.mxu0 0
    %1261 = vmatprep.subr.bf16.mxu0 0
    %1262 = vmatpush1.bf16.msra.mxu0 0
    %1263 = vmatprep.subr.bf16.mxu0 0
    %1264 = vmatpush1.bf16.msra.mxu0 0
    %1265 = vmatprep.mubr.bf16.mxu0 0
    %1266 = vmatmul.mubr.bf16.gmra.mrb[0].mxu0 %v909
    %v1267 = vpop.f32.mrb[0].mxu0
    %v1268 = vadd.f32 %v970, %v1267
    %v1269 = vpop.f32.mrb[0].mxu0
    %v1270 = vadd.f32 %v974, %v1269
    %v1271 = vpop.f32.mrb[0].mxu0
    %v1272 = vpop.f32.mrb[0].mxu0
    %1273 = vdwg.mxu0
    %1274 = vmatprep.subr.bf16.mxu0 0
    %1275 = vmatpush1.bf16.msra.mxu0 %v1116
    %1276 = vmatprep.subr.bf16.mxu0 0
    %1277 = vmatpush1.bf16.msra.mxu0 %v1121
    %1278 = vmatprep.subr.bf16.mxu0 0
    %1279 = vmatpush1.bf16.msra.mxu0 %v1126
    %1280 = vmatprep.subr.bf16.mxu0 0
    %1281 = vmatpush1.bf16.msra.mxu0 %v1131
    %1282 = vmatprep.subr.bf16.mxu0 0
    %1283 = vmatpush1.bf16.msra.mxu0 %v1136
    %1284 = vmatprep.subr.bf16.mxu0 0
    %1285 = vmatpush1.bf16.msra.mxu0 %v1141
    %1286 = vmatprep.subr.bf16.mxu0 0
    %1287 = vmatpush1.bf16.msra.mxu0 %v1146
    %1288 = vmatprep.subr.bf16.mxu0 0
    %1289 = vmatpush1.bf16.msra.mxu0 %v1151
    %1290 = vmatprep.subr.bf16.mxu0 0
    %1291 = vmatpush1.bf16.msra.mxu0 0
    %1292 = vmatprep.subr.bf16.mxu0 0
    %1293 = vmatpush1.bf16.msra.mxu0 0
    %1294 = vmatprep.subr.bf16.mxu0 0
    %1295 = vmatpush1.bf16.msra.mxu0 0
    %1296 = vmatprep.subr.bf16.mxu0 0
    %1297 = vmatpush1.bf16.msra.mxu0 0
    %1298 = vmatprep.subr.bf16.mxu0 0
    %1299 = vmatpush1.bf16.msra.mxu0 0
    %1300 = vmatprep.subr.bf16.mxu0 0
    %1301 = vmatpush1.bf16.msra.mxu0 0
    %1302 = vmatprep.subr.bf16.mxu0 0
    %1303 = vmatpush1.bf16.msra.mxu0 0
    %1304 = vmatprep.subr.bf16.mxu0 0
    %1305 = vmatpush1.bf16.msra.mxu0 0
    %1306 = vmatprep.mubr.bf16.mxu0 0
    %1307 = vmatmul.mubr.bf16.gmra.mrb[0].mxu0 %v909
    %v1308 = vpop.f32.mrb[0].mxu0
    %v1309 = vadd.f32 %v978, %v1308
    %v1310 = vpop.f32.mrb[0].mxu0
    %v1311 = vpop.f32.mrb[0].mxu0
    %v1312 = vpop.f32.mrb[0].mxu0
    %1313 = vdwg.mxu0
    %v1314 = vxor.u32 %v1227, 2147483648
    %v1315 = vxor.u32 %v1229, 2147483648
    %v1316 = vxor.u32 %v1268, 2147483648
    %v1317 = vxor.u32 %v1270, 2147483648
    %v1318 = vmul.f32 %v1314, 1.442695
    %v1319 = vpow.pop %v1318
    %v1320 = vmul.f32 %v1315, 1.442695
    %v1321 = vpow.pop %v1320
    %v1322 = vmul.f32 %v1316, 1.442695
    %v1323 = vpow.pop %v1322
    %v1324 = vmul.f32 %v1317, 1.442695
    %v1325 = vpow.pop %v1324
    %v1326 = vadd.f32 %v1319, 1.0
    %v1327 = vadd.f32 %v1321, 1.0
    %v1328 = vadd.f32 %v1323, 1.0
    %v1329 = vadd.f32 %v1325, 1.0
    %v1330 = vrcp.pop %v1326
    %v1331 = vmul.f32 1.0, %v1330
    %v1332 = vrcp.pop %v1327
    %v1333 = vmul.f32 1.0, %v1332
    %v1334 = vrcp.pop %v1328
    %v1335 = vmul.f32 1.0, %v1334
    %v1336 = vrcp.pop %v1329
    %v1337 = vmul.f32 1.0, %v1336
    %1338 = vst [vmem:[%s4] sm:$0xff] %v1331
    %1339 = vst [vmem:[%s4 + $0x8] sm:$0xff] %v1333
    %1340 = vst [vmem:[%s4 + $0x10] sm:$0xff] %v1335
    %1341 = vst [vmem:[%s4 + $0x18] sm:$0xff] %v1337
    %v1342 = vmul.f32 %v1309, 1.442695
    %v1343 = vpow.pop %v1342
    %1344 = vadd.xlane.f32.xlu0 %v1343
    %v1345 = vpop.xlane.xlu0 %1344
    %v1346 = vrcp.pop %v1345
    %v1347 = vmul.f32 %v1343, %v1346
    %1348 = vst [vmem:[%s4 + $0x20] sm:$0xff] %v1347
    // Predicated region
    $region22: #{bc_forward.1} parent=1 // pred_check
      _
    $region23: #{bc_forward.1} parent=1 // pred_check_branch
      %1350 = sbr.rel (0) target = $region25
    $region24: #{bc_forward.1} parent=1 // pred_region
      _
    $region25: #{bc_forward.1} parent=1 // pred_fallthru
      _
    // Predicated region
    $region26: #{bc_forward.1} parent=1 // pred_check
      _
    $region27: #{bc_forward.1} parent=1 // pred_check_branch
      %1352 = sbr.rel (0) target = $region29
    $region28: #{bc_forward.1} parent=1 // pred_region
      _
    $region29: #{bc_forward.1} parent=1 // pred_fallthru
      _
    %1353 = vsyncpa [#allocation3], 1

</llo_original>
